<compile_context>
chip_gen: v6e
topology: v6e:2x2x1
jax: 0.10.0
libtpu: 0.0.40
codegen_flags: <defaults>
</compile_context>

<pallas_src>
import functools

import jax
import jax.numpy as jnp
from jax import lax
from jax.experimental import pallas as pl
from jax.experimental.pallas import tpu as pltpu


def _round_up(x: int, m: int) -> int:
    return ((x + m - 1) // m) * m


def _similarity_kernel(texts_ref, ex_ref, sim_ref, *, n_valid, n_pad):
    """sim[b, n] = sum_h texts[b, h] * examplars[n, h], padded cols -> -inf.

    dot_general contracts on H for BOTH operands (NT form), so Mosaic feeds
    the MXU directly without materializing a transposed examplar tile.
    bf16/f32 operands, f32 accumulation, f32 output.
    """
    sim = lax.dot_general(
        texts_ref[...],
        ex_ref[...],
        dimension_numbers=(((1,), (1,)), ((), ())),
        preferred_element_type=jnp.float32,
    )
    if n_valid < n_pad:
        # Output block spans the full padded N axis, so in-block column index
        # == global column index.  Masking here is VPU work hidden under the
        # MXU and makes padded columns sort last for any downstream ranking.
        col = lax.broadcasted_iota(jnp.int32, sim.shape, 1)
        sim = jnp.where(col < n_valid, sim, -jnp.inf)
    sim_ref[...] = sim


def _vmem_policy():
    """(budget_bytes for tile sizing, vmem_limit_bytes for the compiler)."""
    cap = None
    try:
        info = pltpu.get_tpu_info()
        cap = getattr(info, "vmem_capacity_bytes", None)
    except Exception:
        cap = None
    if cap is not None and cap >= (96 << 20):
        # v5e / v6e: 128 MiB physical VMEM -> big tiles, generous limit.
        return 64 << 20, 100 << 20
    # v7x (64 MiB physical per TC) or unknown chip -> conservative.
    return 24 << 20, 48 << 20


def _choose_batch_tile(B: int, H: int, N_pad: int,
                       in_itemsize: int, out_itemsize: int,
                       budget_bytes: int) -> int:
    """Pick a batch tile (multiple of 8, <=512) whose pipelined VMEM footprint
    fits under the budget.  NOTE: Pallas double-buffers EVERY input (even the
    grid-invariant examplar block) and the output, so all three are counted
    twice here."""
    tb = min(512, _round_up(B, 8))
    while tb > 8:
        footprint = (in_itemsize * 2 * (tb * H + N_pad * H)
                     + out_itemsize * 2 * tb * N_pad)
        if footprint <= budget_bytes:
            break
        tb = max(8, _round_up(tb // 2, 8))
    return tb


def kg_rank_examplars(texts_embeddings, examplars_embeddings, *,
                      num_examplars=None, use_bf16=True):
    """Pallas-accelerated core of KGGenerator.rank_examplars.

    Returns (similarities, ranked_examplars_indices), matching
      torch.matmul(texts_embeddings, examplars_embeddings.T)
      torch.argsort(similarities, dim=1, descending=True)
    If `num_examplars` is given, only the top-k indices are returned (that is
    all `get_documents_inputs` consumes downstream), via lax.top_k instead of
    a full per-row sort.
    `use_bf16=True` streams operands in bf16 (f32 accumulation); set False for
    bit-exact tie ordering vs the f32 torch reference.
    """
    B, H = texts_embeddings.shape
    N, H2 = examplars_embeddings.shape
    assert H == H2, "hidden dims must match"

    compute_dtype = jnp.bfloat16 if use_bf16 else jnp.float32
    texts = texts_embeddings.astype(compute_dtype)
    ex = examplars_embeddings.astype(compute_dtype)

    # Lane-dense output: pad examplar count up to a multiple of 128.  The
    # examplar matrix is a small frozen buffer, so this padding is free; the
    # padded similarity columns are masked to -inf inside the kernel.
    N_pad = _round_up(N, 128)

    in_itemsize = jnp.dtype(compute_dtype).itemsize
    budget_bytes, vmem_limit_bytes = _vmem_policy()
    TB = _choose_batch_tile(B, H, N_pad, in_itemsize, 4, budget_bytes)
    # Guarantee >= 2 batch tiles when possible so both v7x TensorCores get
    # work under the "parallel" grid axis.
    while _round_up(B, TB) // TB < 2 and TB > 8:
        TB = _round_up(max(TB // 2, 8), 8)
    B_pad = _round_up(B, TB)

    if B_pad != B:
        texts = jnp.pad(texts, ((0, B_pad - B), (0, 0)))
    if N_pad != N:
        ex = jnp.pad(ex, ((0, N_pad - N), (0, 0)))

    grid = (B_pad // TB,)

    cost = pl.CostEstimate(
        flops=2 * B_pad * N_pad * H,
        transcendentals=0,
        bytes_accessed=in_itemsize * (B_pad * H + N_pad * H)
        + 4 * B_pad * N_pad,
    )

    kernel = functools.partial(_similarity_kernel, n_valid=N, n_pad=N_pad)

    similarities_p = pl.pallas_call(
        kernel,
        out_shape=jax.ShapeDtypeStruct((B_pad, N_pad), jnp.float32),
        grid_spec=pltpu.PrefetchScalarGridSpec(
            num_scalar_prefetch=0,
            grid=grid,
            in_specs=[
                # batch-tiled texts stream
                pl.BlockSpec((TB, H), lambda i: (i, 0)),
                # examplars: grid-invariant block, stays VMEM-resident
                pl.BlockSpec((N_pad, H), lambda i: (0, 0)),
            ],
            out_specs=pl.BlockSpec((TB, N_pad), lambda i: (i, 0)),
        ),
        compiler_params=pltpu.CompilerParams(
            # batch tiles are independent -> megacore-shardable on v7x
            dimension_semantics=("parallel",),
            vmem_limit_bytes=vmem_limit_bytes,
        ),
        cost_estimate=cost,
    )(texts, ex)

    similarities = similarities_p[:B, :N]

    # TODO(synk): the descending ranking (index permutation) has no clean
    # Pallas TPU equivalent; done in plain JAX on the padded, -inf-masked
    # output (padded columns always sort last).  jnp.argsort is stable while
    # torch.argsort makes no stability guarantee, so equal-similarity ties
    # may order differently than PyTorch.
    if num_examplars is not None:
        k = min(num_examplars, N)
        _, ranked_indices = lax.top_k(similarities_p[:B], k)
    else:
        ranked_indices = jnp.argsort(
            similarities_p, axis=1, descending=True)[:B, :N]
    return similarities, ranked_indices


def _l2_normalize(x, axis=-1, eps=1e-12):
    return x / jnp.maximum(jnp.linalg.norm(x, axis=axis, keepdims=True), eps)


if __name__ == "__main__":
    # Small synthetic shapes consistent with the module:
    #   B = batch of documents being ranked, N = number of examplars,
    #   H = embedding hidden size (e5-style, L2-normalized).
    B, N, H = 8, 16, 128

    key = jax.random.PRNGKey(0)
    k_texts, k_ex = jax.random.split(key)
    # Deterministic synthetic "e5" embeddings (the real module computes these
    # with a frozen retriever; we just need matching shapes/dtypes).
    texts_embeddings = _l2_normalize(
        jax.random.normal(k_texts, (B, H), dtype=jnp.float32))
    examplars_embeddings = _l2_normalize(
        jax.random.normal(k_ex, (N, H), dtype=jnp.float32))

    # --- exact f32 path: matches torch.matmul reference bit-for-bit ---------
    sims_f32, ranked_f32 = kg_rank_examplars(
        texts_embeddings, examplars_embeddings, use_bf16=False)
    sims_f32 = jax.block_until_ready(sims_f32)
    ranked_f32 = jax.block_until_ready(ranked_f32)
    assert sims_f32.shape == (B, N)
    ref_sims = texts_embeddings @ examplars_embeddings.T
    assert jnp.allclose(sims_f32, ref_sims, atol=1e-5, rtol=1e-5), \
        "f32 similarity mismatch"
    ref_idx = jnp.argsort(ref_sims, axis=1, descending=True)
    assert jnp.array_equal(ranked_f32, ref_idx), "f32 ranking mismatch"

    # --- default bf16-streamed path (f32 accumulation) ----------------------
    sims_bf16, ranked_bf16 = kg_rank_examplars(
        texts_embeddings, examplars_embeddings, use_bf16=True)
    sims_bf16 = jax.block_until_ready(sims_bf16)
    ranked_bf16 = jax.block_until_ready(ranked_bf16)
    tb = texts_embeddings.astype(jnp.bfloat16)
    eb = examplars_embeddings.astype(jnp.bfloat16)
    ref_bf16 = lax.dot_general(tb, eb, (((1,), (1,)), ((), ())),
                               preferred_element_type=jnp.float32)
    assert jnp.allclose(sims_bf16, ref_bf16, atol=1e-4, rtol=1e-4), \
        "bf16 similarity mismatch"
    assert ranked_bf16.shape == (B, N)

    # --- top-k path (what get_documents_inputs actually consumes) -----------
    _, top5 = kg_rank_examplars(texts_embeddings, examplars_embeddings,
                                num_examplars=5, use_bf16=False)
    top5 = jax.block_until_ready(top5)
    assert jnp.array_equal(top5, ref_idx[:, :5]), "top-k mismatch"

    # The rest of KGGenerator.forward (prompt building, tokenizer encode,
    # generator.generate, regex triple parsing) is non-tensor string/LLM
    # orchestration with no Pallas equivalent.
    print("KERNEL_OK")
</pallas_src>

<mosaic_0001>
module attributes {stable_mosaic.version = 11 : i64} {
  func.func @_similarity_kernel(%arg0: i32, %arg1: memref<8x128xf32, #tpu.memory_space<vmem>>, %arg2: memref<128x128xf32, #tpu.memory_space<vmem>>, %arg3: memref<8x128xf32, #tpu.memory_space<vmem>>) attributes {dimension_semantics = [#tpu.dimension_semantics<parallel>], iteration_bounds = array<i64: 1>, scalar_prefetch = 0 : i64, scratch_operands = 0 : i64, tpu.core_type = #tpu.core_type<tc>, window_params = [{transform_indices = @transform_0, window_bounds = array<i64: 8, 128>}, {pipeline_mode = #tpu.pipeline_mode<synchronous>, transform_indices = @transform_1, window_bounds = array<i64: 128, 128>}, {transform_indices = @transform_2, window_bounds = array<i64: 8, 128>}]} {
    %c0 = arith.constant 0 : index
    %c0_0 = arith.constant 0 : index
    %0 = vector.load %arg1[%c0, %c0_0] : memref<8x128xf32, #tpu.memory_space<vmem>>, vector<8x128xf32>
    %c0_1 = arith.constant 0 : index
    %c0_2 = arith.constant 0 : index
    %1 = vector.load %arg2[%c0_1, %c0_2] : memref<128x128xf32, #tpu.memory_space<vmem>>, vector<128x128xf32>
    %cst = arith.constant dense<0.000000e+00> : vector<8x128xf32>
    %2 = tpu.matmul %0, %1, %cst {dimension_numbers = #tpu.dot_dimension_numbers<[1], [1], [0], [0], [0, 0, 1, 0], [], []>} : vector<8x128xf32>, vector<128x128xf32>, vector<8x128xf32> -> vector<8x128xf32>
    %3 = tpu.iota {dimensions = array<i32: 1>} : vector<8x128xi32>
    %c16_i32 = arith.constant 16 : i32
    %4 = vector.broadcast %c16_i32 : i32 to vector<8x128xi32>
    %5 = arith.cmpi slt, %3, %4 : vector<8x128xi32>
    %cst_3 = arith.constant 0xFF800000 : f32
    %6 = vector.broadcast %cst_3 : f32 to vector<8x128xf32>
    %7 = arith.select %5, %2, %6 : vector<8x128xi1>, vector<8x128xf32>
    %c0_4 = arith.constant 0 : index
    %c0_5 = arith.constant 0 : index
    %8 = vector.load %arg3[%c0_4, %c0_5] : memref<8x128xf32, #tpu.memory_space<vmem>>, vector<8x128xf32>
    tpu.vector_store %arg3[%c0_4, %c0_5], %7 {strides = array<i32>} : memref<8x128xf32, #tpu.memory_space<vmem>>, vector<8x128xf32>,
    return
  }
  func.func @transform_0(%arg0: i32) -> (i32, i32) {
    %c0_i32 = arith.constant 0 : i32
    %c0_i32_0 = arith.constant 0 : i32
    return %arg0, %c0_i32 : i32, i32
  }
  func.func @transform_1(%arg0: i32) -> (i32, i32) {
    %c0_i32 = arith.constant 0 : i32
    %c0_i32_0 = arith.constant 0 : i32
    %c0_i32_1 = arith.constant 0 : i32
    return %c0_i32, %c0_i32_0 : i32, i32
  }
  func.func @transform_2(%arg0: i32) -> (i32, i32) {
    %c0_i32 = arith.constant 0 : i32
    %c0_i32_0 = arith.constant 0 : i32
    return %arg0, %c0_i32 : i32, i32
  }
}

</mosaic_0001>

<llo_original>
// kernel: tpu_custom_call.1
$region0: #{tpu_custom_call.1}
  #allocation0 [shape = 'u32[]', space=smem, size = 0x4, offset = 0x4, fixed_abs, tag = 'smem constant byte address 0x4 - core index']
  #allocation1 [shape = 'u32[144,128]{1,0:T(1,128)}', space=vmem, size = 0x12000, scoped, tag = 'internal scratch']
  %s0 = inlined_call_operand.hbm [shape: f32[8,128], index: 0, kind: input, shape index: {}]
  %s1 = inlined_call_operand.hbm [shape: f32[128,128], index: 1, kind: input, shape index: {}]
  %s2 = inlined_call_operand.hbm [shape: f32[8,128], index: 2, kind: output, shape index: {}]
  %s3 = sld [smem:[#allocation0]]
  $region26: #{tpu_custom_call.1} parent=0
    _
  %s5 = ssub.s32 1, %s3
  %s6 = scalar_select 0, %s5, %s3
  $region1: #{tpu_custom_call.1} parent=0
    #allocation2 [shape = 'u8[4096]{0}', space=vmem, size = 0x1000, scoped, tag = 'input window, operand 0, single buffered']
    #allocation3 [shape = 's32[1]{0}', space=sflag, size = 0x4, scoped, tag = 'scoped memory for tpu_custom_call.1']
    #allocation4 [shape = 's32[1]{0}', space=sflag, size = 0x4, scoped, tag = 'scoped memory for tpu_custom_call.1']
    #allocation5 [shape = 'u8[65536]{0}', space=vmem, size = 0x10000, scoped, tag = 'input window, operand 1, single buffered']
    #allocation6 [shape = 's32[1]{0}', space=sflag, size = 0x4, scoped, tag = 'scoped memory for tpu_custom_call.1']
    #allocation7 [shape = 'u8[4096]{0}', space=vmem, size = 0x1000, scoped, tag = 'output window, operand 0, single buffered']
    %7 = vsyncpa [#allocation3], 0
    %8 = vsyncpa [#allocation6], 0
    %9 = vsyncpa [#allocation4], 0
    // Predicated region
    $region2: #{tpu_custom_call.1} parent=1 // pred_check
      _
    $region3: #{tpu_custom_call.1} parent=1 // pred_check_branch
      %11 = sbr.rel (0) target = $region5
    $region4: #{tpu_custom_call.1} parent=1 // pred_region
      %s13 = ssub.s32 128, 128
      %14 = vsyncadd [#allocation3], %s13
      %s16 = sshll.u32 [#allocation2], 4
      %s17 = int_to_ptr.vmem [resolvable:$true] %s16
      %19 = dma.hbm_to_vmem [thread:$0]  %s0, 128, %s17, [#allocation3]
    $region5: #{tpu_custom_call.1} parent=1 // pred_fallthru
      _
    // Predicated region
    $region6: #{tpu_custom_call.1} parent=1 // pred_check
      _
    $region7: #{tpu_custom_call.1} parent=1 // pred_check_branch
      %21 = sbr.rel (0) target = $region9
    $region8: #{tpu_custom_call.1} parent=1 // pred_region
      %s23 = ssub.s32 2048, 2048
      %24 = vsyncadd [#allocation6], %s23
      %s25 = sshll.u32 [#allocation5], 4
      %s26 = int_to_ptr.vmem [resolvable:$true] %s25
      %31 = dma.hbm_to_vmem [thread:$0]  %s1, 2048, %s26, [#allocation6], 128, 128, 8
    $region9: #{tpu_custom_call.1} parent=1 // pred_fallthru
      _
    // Predicated region
    $region10: #{tpu_custom_call.1} parent=1 // pred_check
      _
    $region11: #{tpu_custom_call.1} parent=1 // pred_check_branch
      %33 = sbr.rel (0) target = $region13
    $region12: #{tpu_custom_call.1} parent=1 // pred_region
      %34 = dma.done [#allocation3], 128
    $region13: #{tpu_custom_call.1} parent=1 // pred_fallthru
      _
    // Predicated region
    $region14: #{tpu_custom_call.1} parent=1 // pred_check
      _
    $region15: #{tpu_custom_call.1} parent=1 // pred_check_branch
      %36 = sbr.rel (0) target = $region17
    $region16: #{tpu_custom_call.1} parent=1 // pred_region
      %37 = dma.done [#allocation6], 2048
    $region17: #{tpu_custom_call.1} parent=1 // pred_fallthru
      _
    %v38 = vld [vmem:[#allocation2] sm:$0xff]
    %v39 = vld [vmem:[#allocation5] sm:$0xff]
    %v40 = vld [vmem:[#allocation5 + $0x8] sm:$0xff]
    %v41 = vld [vmem:[#allocation5 + $0x10] sm:$0xff]
    %v42 = vld [vmem:[#allocation5 + $0x18] sm:$0xff]
    %v43 = vld [vmem:[#allocation5 + $0x20] sm:$0xff]
    %v44 = vld [vmem:[#allocation5 + $0x28] sm:$0xff]
    %v45 = vld [vmem:[#allocation5 + $0x30] sm:$0xff]
    %v46 = vld [vmem:[#allocation5 + $0x38] sm:$0xff]
    %v47 = vld [vmem:[#allocation5 + $0x40] sm:$0xff]
    %v48 = vld [vmem:[#allocation5 + $0x48] sm:$0xff]
    %v49 = vld [vmem:[#allocation5 + $0x50] sm:$0xff]
    %v50 = vld [vmem:[#allocation5 + $0x58] sm:$0xff]
    %v51 = vld [vmem:[#allocation5 + $0x60] sm:$0xff]
    %v52 = vld [vmem:[#allocation5 + $0x68] sm:$0xff]
    %v53 = vld [vmem:[#allocation5 + $0x70] sm:$0xff]
    %v54 = vld [vmem:[#allocation5 + $0x78] sm:$0xff]
    %55 = vmatprep.subr.mxu0 0.0
    %56 = vmatpush1.xpose.msra.mxu0 %v54
    %57 = vmatprep.subr.mxu0 0.0
    %58 = vmatpush1.xpose.msra.mxu0 %v53
    %59 = vmatprep.subr.mxu0 0.0
    %60 = vmatpush1.xpose.msra.mxu0 %v52
    %61 = vmatprep.subr.mxu0 0.0
    %62 = vmatpush1.xpose.msra.mxu0 %v51
    %63 = vmatprep.subr.mxu0 0.0
    %64 = vmatpush1.xpose.msra.mxu0 %v50
    %65 = vmatprep.subr.mxu0 0.0
    %66 = vmatpush1.xpose.msra.mxu0 %v49
    %67 = vmatprep.subr.mxu0 0.0
    %68 = vmatpush1.xpose.msra.mxu0 %v48
    %69 = vmatprep.subr.mxu0 0.0
    %70 = vmatpush1.xpose.msra.mxu0 %v47
    %71 = vmatprep.subr.mxu0 0.0
    %72 = vmatpush1.xpose.msra.mxu0 %v46
    %73 = vmatprep.subr.mxu0 0.0
    %74 = vmatpush1.xpose.msra.mxu0 %v45
    %75 = vmatprep.subr.mxu0 0.0
    %76 = vmatpush1.xpose.msra.mxu0 %v44
    %77 = vmatprep.subr.mxu0 0.0
    %78 = vmatpush1.xpose.msra.mxu0 %v43
    %79 = vmatprep.subr.mxu0 0.0
    %80 = vmatpush1.xpose.msra.mxu0 %v42
    %81 = vmatprep.subr.mxu0 0.0
    %82 = vmatpush1.xpose.msra.mxu0 %v41
    %83 = vmatprep.subr.mxu0 0.0
    %84 = vmatpush1.xpose.msra.mxu0 %v40
    %85 = vmatprep.subr.mxu0 0.0
    %86 = vmatpush1.xpose.msra.mxu0 %v39
    %87 = vmatprep.subr.mxu0 0.0
    %88 = vmatpush2.xpose.msra.mxu0 0.0
    %89 = vmatprep.subr.mxu0 0.0
    %90 = vmatpush2.xpose.msra.mxu0 0.0
    %91 = vmatprep.subr.mxu0 0.0
    %92 = vmatpush2.xpose.msra.mxu0 0.0
    %93 = vmatprep.subr.mxu0 0.0
    %94 = vmatpush2.xpose.msra.mxu0 0.0
    %95 = vmatprep.subr.mxu0 0.0
    %96 = vmatpush2.xpose.msra.mxu0 0.0
    %97 = vmatprep.subr.mxu0 0.0
    %98 = vmatpush2.xpose.msra.mxu0 0.0
    %99 = vmatprep.subr.mxu0 0.0
    %100 = vmatpush2.xpose.msra.mxu0 0.0
    %101 = vmatprep.subr.mxu0 0.0
    %102 = vmatpush2.xpose.msra.mxu0 0.0
    %103 = vmatprep.subr.mxu0 0.0
    %104 = vmatpush2.xpose.msra.mxu0 0.0
    %105 = vmatprep.subr.mxu0 0.0
    %106 = vmatpush2.xpose.msra.mxu0 0.0
    %107 = vmatprep.subr.mxu0 0.0
    %108 = vmatpush2.xpose.msra.mxu0 0.0
    %109 = vmatprep.subr.mxu0 0.0
    %110 = vmatpush2.xpose.msra.mxu0 0.0
    %111 = vmatprep.subr.mxu0 0.0
    %112 = vmatpush2.xpose.msra.mxu0 0.0
    %113 = vmatprep.subr.mxu0 0.0
    %114 = vmatpush2.xpose.msra.mxu0 0.0
    %115 = vmatprep.subr.mxu0 0.0
    %116 = vmatpush2.xpose.msra.mxu0 0.0
    %117 = vmatprep.subr.mxu0 0.0
    %118 = vmatpush2.xpose.msra.mxu0 0.0
    %119 = vmatprep.mubr.f32.mxu0 0.0
    %120 = vmatmul.mubr.f32.gmra.mxu0 %v38
    %v121 = vpop.f32.mrf.mxu0
    %v122 = vadd.f32 0.0, %v121
    %v123 = vpop.f32.mrf.mxu0
    %124 = vdwg.mxu0
    %v125 = vlaneseq
    %v126 = vand.u32 %v125, 127
    %vm127 = vcmp.lt.s32.totalorder %v126, 16
    %v128 = vsel %vm127, %v122, -inf
    %129 = vst [vmem:[#allocation7] sm:$0xff] %v128
    // Predicated region
    $region18: #{tpu_custom_call.1} parent=1 // pred_check
      _
    $region19: #{tpu_custom_call.1} parent=1 // pred_check_branch
      %131 = sbr.rel (0) target = $region21
    $region20: #{tpu_custom_call.1} parent=1 // pred_region
      %s133 = ssub.s32 128, 128
      %134 = vsyncadd [#allocation4], %s133
      %s136 = sshll.u32 [#allocation7], 4
      %s137 = int_to_ptr.vmem [resolvable:$true] %s136
      %139 = dma.vmem_to_hbm [thread:$0]  %s137, 128, %s2, [#allocation4]
    $region21: #{tpu_custom_call.1} parent=1 // pred_fallthru
      _
    // Predicated region
    $region22: #{tpu_custom_call.1} parent=1 // pred_check
      _
    $region23: #{tpu_custom_call.1} parent=1 // pred_check_branch
      %141 = sbr.rel (0) target = $region25
    $region24: #{tpu_custom_call.1} parent=1 // pred_region
      %142 = dma.done [#allocation4], 128
    $region25: #{tpu_custom_call.1} parent=1 // pred_fallthru
      _
    %143 = vsyncpa [#allocation3], 1
    %144 = vsyncpa [#allocation6], 1
    %145 = vsyncpa [#allocation4], 1

</llo_original>
